<compile_context>
chip_gen: v7x
topology: tpu7x:2x2x1
jax: 0.10.0
libtpu: 0.0.40
codegen_flags: <defaults>
</compile_context>

<pallas_src>
import functools
import math

import jax
import jax.numpy as jnp
from jax.experimental import pallas as pl
from jax.experimental.pallas import tpu as pltpu


def _sigmoid_kernel(w_ref, o_ref, *, m):
    # const == ones -> x = weights;  sigmoid_custom(x, m) == sigmoid(m * x)
    o_ref[...] = jax.nn.sigmoid(jnp.float32(m) * w_ref[...])


def _sigmoid_mul_kernel(w_ref, c_ref, o_ref, *, m):
    # General path (const may differ from ones).
    o_ref[...] = jax.nn.sigmoid(jnp.float32(m) * (w_ref[...] * c_ref[...]))


def _flat_shape(shape):
    """Lane-dense 2D view of the tensor: last dim = 128 when possible."""
    total = math.prod(shape)
    if total % 128 == 0:
        return (total // 128, 128)
    # Fallback: flatten to (N*T, H*W); full-array dims are always a valid block.
    return (shape[0] * shape[1], shape[2] * shape[3])


def modelH_forward(weights, const=None, m=1.0):
    """weights: (1, T, H, W) float32.  Returns sigmoid(m * weights * const).

    If const is None it is taken to be all-ones (as defined by modelH_class),
    and the multiply / extra HBM load are skipped entirely.
    """
    orig_shape = weights.shape
    rows, cols = _flat_shape(orig_shape)

    # Single block for small problems; 512-row tiles if the tensor is large
    # (keeps per-block footprint VMEM-friendly on v7x and near roofline on v6e).
    if rows > 1024 and rows % 512 == 0:
        block_rows = 512
        grid = (rows // 512,)
    else:
        block_rows = rows
        grid = (1,)

    block = (block_rows, cols)
    spec = pl.BlockSpec(block, lambda i: (i, 0))

    w2 = weights.reshape(rows, cols)
    out_shape = jax.ShapeDtypeStruct((rows, cols), weights.dtype)
    cparams = pltpu.CompilerParams(dimension_semantics=("parallel",))

    if const is None:
        out2 = pl.pallas_call(
            functools.partial(_sigmoid_kernel, m=float(m)),
            out_shape=out_shape,
            grid=grid,
            in_specs=[spec],
            out_specs=spec,
            compiler_params=cparams,
        )(w2)
    else:
        c2 = const.reshape(rows, cols)
        out2 = pl.pallas_call(
            functools.partial(_sigmoid_mul_kernel, m=float(m)),
            out_shape=out_shape,
            grid=grid,
            in_specs=[spec, spec],
            out_specs=spec,
            compiler_params=cparams,
        )(w2, c2)

    return out2.reshape(orig_shape)


if __name__ == "__main__":
    # Small shapes consistent with the module: T=8, img_size=16.
    T = 8
    img_size = 16
    initialization_bias = 0.0

    key = jax.random.PRNGKey(0)
    # init_method='randn': weights = bias + randn((1, T, img, img))
    weights = initialization_bias + jax.random.normal(
        key, (1, T, img_size, img_size), dtype=jnp.float32
    )
    # Module defines const = ones_like(weights); the optimized path exploits this
    # and skips the load.  The general (const-carrying) path is also exercised.
    const = jnp.ones_like(weights)
    m = 1.0

    # Optimized path (const statically ones -> dropped).
    out = modelH_forward(weights, const=None, m=m)
    out = jax.block_until_ready(out)

    # General path (keeps the weights * const multiply in-kernel).
    out_general = modelH_forward(weights, const=const, m=m)
    out_general = jax.block_until_ready(out_general)

    # Reference check (plain JAX).
    ref = jax.nn.sigmoid(m * (weights * const))
    assert out.shape == (1, T, img_size, img_size)
    assert jnp.allclose(out, ref, atol=1e-6, rtol=1e-5)
    assert jnp.allclose(out_general, ref, atol=1e-6, rtol=1e-5)

    print("KERNEL_OK")
</pallas_src>

<mosaic_0001>
module attributes {stable_mosaic.version = 11 : i64} {
  func.func @_sigmoid_kernel(%arg0: i32, %arg1: memref<16x128xf32, #tpu.memory_space<vmem>>, %arg2: memref<16x128xf32, #tpu.memory_space<vmem>>) attributes {dimension_semantics = [#tpu.dimension_semantics<parallel>], iteration_bounds = array<i64: 1>, scalar_prefetch = 0 : i64, scratch_operands = 0 : i64, tpu.core_type = #tpu.core_type<tc>, window_params = [{transform_indices = @transform_0, window_bounds = array<i64: 16, 128>}, {transform_indices = @transform_1, window_bounds = array<i64: 16, 128>}]} {
    %c0 = arith.constant 0 : index
    %c0_0 = arith.constant 0 : index
    %0 = vector.load %arg1[%c0, %c0_0] : memref<16x128xf32, #tpu.memory_space<vmem>>, vector<16x128xf32>
    %cst = arith.constant 1.000000e+00 : f32
    %1 = vector.broadcast %cst : f32 to vector<16x128xf32>
    %2 = arith.mulf %1, %0 : vector<16x128xf32>
    %3 = arith.negf %2 : vector<16x128xf32>
    %4 = math.exp %3 : vector<16x128xf32>
    %cst_1 = arith.constant 1.000000e+00 : f32
    %5 = vector.broadcast %cst_1 : f32 to vector<16x128xf32>
    %6 = arith.addf %5, %4 : vector<16x128xf32>
    %7 = arith.divf %5, %6 : vector<16x128xf32>
    %c0_2 = arith.constant 0 : index
    %c0_3 = arith.constant 0 : index
    %8 = vector.load %arg2[%c0_2, %c0_3] : memref<16x128xf32, #tpu.memory_space<vmem>>, vector<16x128xf32>
    tpu.vector_store %arg2[%c0_2, %c0_3], %7 {strides = array<i32>} : memref<16x128xf32, #tpu.memory_space<vmem>>, vector<16x128xf32>,
    return
  }
  func.func @transform_0(%arg0: i32) -> (i32, i32) {
    %c0_i32 = arith.constant 0 : i32
    %c0_i32_0 = arith.constant 0 : i32
    return %arg0, %c0_i32 : i32, i32
  }
  func.func @transform_1(%arg0: i32) -> (i32, i32) {
    %c0_i32 = arith.constant 0 : i32
    %c0_i32_0 = arith.constant 0 : i32
    return %arg0, %c0_i32 : i32, i32
  }
}

</mosaic_0001>

<llo_original>
// kernel: tpu_custom_call.1
$region0: #{tpu_custom_call.1}
  #allocation0 [shape = 'u32[]', space=smem, size = 0x4, offset = 0x4, fixed_abs, tag = 'smem constant byte address 0x4 - core index']
  #allocation1 [shape = 'u32[144,128]{1,0:T(1,128)}', space=vmem, size = 0x12000, scoped, tag = 'internal scratch']
  %s0 = inlined_call_operand.hbm [shape: f32[16,128], index: 0, kind: input, shape index: {}]
  %s1 = inlined_call_operand.hbm [shape: f32[16,128], index: 1, kind: output, shape index: {}]
  %s2 = sld [smem:[#allocation0]]
  $region18: #{tpu_custom_call.1} parent=0
    _
  %s4 = ssub.s32 1, %s2
  %s5 = scalar_select 0, %s4, %s2
  $region1: #{tpu_custom_call.1} parent=0
    #allocation2 [shape = 'u8[8192]{0}', space=vmem, size = 0x2000, scoped, tag = 'input window, operand 0, single buffered']
    #allocation3 [shape = 's32[1]{0}', space=sflag, size = 0x4, scoped, tag = 'scoped memory for tpu_custom_call.1']
    #allocation4 [shape = 's32[1]{0}', space=sflag, size = 0x4, scoped, tag = 'scoped memory for tpu_custom_call.1']
    #allocation5 [shape = 'u8[8192]{0}', space=vmem, size = 0x2000, scoped, tag = 'output window, operand 0, single buffered']
    %6 = vsyncpa [#allocation3], 0
    %7 = vsyncpa [#allocation4], 0
    // Predicated region
    $region2: #{tpu_custom_call.1} parent=1 // pred_check
      _
    $region3: #{tpu_custom_call.1} parent=1 // pred_check_branch
      %9 = sbr.rel (0) target = $region5
    $region4: #{tpu_custom_call.1} parent=1 // pred_region
      %s11 = ssub.s32 256, 256
      %12 = vsyncadd [#allocation3], %s11
      %s13 = sshll.u32 [#allocation2], 4
      %s14 = int_to_ptr.vmem [resolvable:$true] %s13
      %19 = dma.hbm_to_vmem [thread:$0]  %s0, 256, %s14, [#allocation3], 128, 128, 8
    $region5: #{tpu_custom_call.1} parent=1 // pred_fallthru
      _
    // Predicated region
    $region6: #{tpu_custom_call.1} parent=1 // pred_check
      _
    $region7: #{tpu_custom_call.1} parent=1 // pred_check_branch
      %21 = sbr.rel (0) target = $region9
    $region8: #{tpu_custom_call.1} parent=1 // pred_region
      %22 = dma.done [#allocation3], 256
    $region9: #{tpu_custom_call.1} parent=1 // pred_fallthru
      _
    %v23 = vld [vmem:[#allocation2] sm:$0xff]
    %v24 = vld [vmem:[#allocation2 + $0x8] sm:$0xff]
    %v25 = vxor.u32 %v23, 2147483648
    %v26 = vxor.u32 %v24, 2147483648
    %v27 = vmul.f32 %v25, 1.442695
    %v28 = vpow.pop %v27
    %v29 = vmul.f32 %v26, 1.442695
    %v30 = vpow.pop %v29
    %v31 = vadd.f32 %v28, 1.0
    %v32 = vadd.f32 %v30, 1.0
    %v33 = vrcp.pop %v31
    %v34 = vmul.f32 1.0, %v33
    %v35 = vrcp.pop %v32
    %v36 = vmul.f32 1.0, %v35
    %37 = vst [vmem:[#allocation5] sm:$0xff] %v34
    %38 = vst [vmem:[#allocation5 + $0x8] sm:$0xff] %v36
    // Predicated region
    $region10: #{tpu_custom_call.1} parent=1 // pred_check
      _
    $region11: #{tpu_custom_call.1} parent=1 // pred_check_branch
      %40 = sbr.rel (0) target = $region13
    $region12: #{tpu_custom_call.1} parent=1 // pred_region
      %s42 = ssub.s32 256, 256
      %43 = vsyncadd [#allocation4], %s42
      %s44 = sshll.u32 [#allocation5], 4
      %s45 = int_to_ptr.vmem [resolvable:$true] %s44
      %50 = dma.vmem_to_hbm [thread:$0]  %s45, 256, %s1, [#allocation4], 128, 128, 8
    $region13: #{tpu_custom_call.1} parent=1 // pred_fallthru
      _
    // Predicated region
    $region14: #{tpu_custom_call.1} parent=1 // pred_check
      _
    $region15: #{tpu_custom_call.1} parent=1 // pred_check_branch
      %52 = sbr.rel (0) target = $region17
    $region16: #{tpu_custom_call.1} parent=1 // pred_region
      %53 = dma.done [#allocation4], 256
    $region17: #{tpu_custom_call.1} parent=1 // pred_fallthru
      _
    %54 = vsyncpa [#allocation3], 1
    %55 = vsyncpa [#allocation4], 1

</llo_original>
